<compile_context>
chip_gen: v7x
topology: tpu7x:2x2x1
jax: 0.10.0
libtpu: 0.0.40
codegen_flags: <defaults>
</compile_context>

<pallas_src>
import jax
import jax.numpy as jnp
from jax import lax
from jax.experimental import pallas as pl
from jax.experimental.pallas import tpu as pltpu

TAU = 3.0
LANES = 128
UNROLL_K_MAX = 64          # fully unroll the mode loop up to this K
MIN_TILE_ROWS = 8          # sublane granularity for tiled blocks


def _cdiv(a, b):
    return -(-a // b)


def _round_up(a, m):
    return _cdiv(a, m) * m


def _fexp_kernel(coeff_ref, x_ref, o_ref):
    # coeff_ref: (K,) float32 in SMEM   (lmbd * a)
    # x_ref:     (tile_rows, 128) float32 block of sample points (lane-dense)
    # o_ref:     (tile_rows, 128) float32 output block
    x = x_ref[...]
    k_max = coeff_ref.shape[0]

    theta = jnp.pi * x
    s_km1 = jnp.sin(theta)                      # s_1 = sin(theta)
    acc = s_km1 * coeff_ref[0]

    if k_max == 1:
        o_ref[...] = acc
        return

    c2 = 2.0 * jnp.cos(theta)
    s_k = c2 * s_km1                            # s_2 = 2*cos(theta)*s_1  (s_0 == 0)
    acc = acc + s_k * coeff_ref[1]

    if k_max <= UNROLL_K_MAX:
        # Static unroll: ~3 VALU ops per mode, no transcendentals in the chain.
        for k in range(3, k_max + 1):
            s_km1, s_k = s_k, c2 * s_k - s_km1
            acc = acc + s_k * coeff_ref[k - 1]
    else:
        # Large K: bounded live ranges via fori_loop carry, moderate unroll.
        def body(k, carry):
            s_prev, s_cur, a_ = carry
            s_next = c2 * s_cur - s_prev        # s_{k+1}
            a_ = a_ + s_next * coeff_ref[k]     # coeff index k == mode k+1
            return (s_cur, s_next, a_)

        s_km1, s_k, acc = lax.fori_loop(2, k_max, body, (s_km1, s_k, acc), unroll=8)

    o_ref[...] = acc


def function_expansion_forward(a, x, *, max_tile_rows=2048):
    """Pallas implementation of FunctionExpansion.forward (= ExactSolution.f).

    a: (K,) float32 expansion coefficients (the nn.Parameter)
    x: (N, 1) float32 sample points (any N; padded internally only if needed)
    returns: (N, 1) float32
    """
    a = jnp.asarray(a, jnp.float32)
    x = jnp.asarray(x, jnp.float32)
    assert x.ndim == 2 and x.shape[1] == 1
    K = a.shape[0]
    N = x.shape[0]

    if K == 0:
        return jnp.zeros((N, 1), jnp.float32)

    indices = jnp.arange(1, K + 1, dtype=jnp.float32)                 # (K,)
    lmbd = 1.0 / jnp.sqrt(indices ** 2 * jnp.pi ** 2 + TAU ** 2)      # (K,)
    coeff = lmbd * a                                                  # (K,) -> SMEM

    # Lane-dense layout: N on the 128-lane axis, rows on the sublane axis.
    rows = _cdiv(N, LANES)

    if rows < 2 * MIN_TILE_ROWS:
        # Small problem: one grid step; block shape == full array shape, so the
        # (8,128) divisibility constraint does not apply.
        grid_steps = 1
        tile_rows = rows
    else:
        # Large N: >= 2 (preferably even) parallel grid steps so both v7x
        # TensorCores are fed; tiles capped at max_tile_rows (1 MiB f32 @ 2048).
        rows8 = _round_up(rows, MIN_TILE_ROWS)
        grid_steps = max(2, _cdiv(rows8, max_tile_rows))
        if grid_steps % 2 == 1 and _cdiv(rows8, grid_steps + 1) >= MIN_TILE_ROWS:
            grid_steps += 1
        tile_rows = _round_up(_cdiv(rows8, grid_steps), MIN_TILE_ROWS)

    rows_total = tile_rows * grid_steps
    total = rows_total * LANES

    x_flat = x[:, 0]
    if total != N:                  # pad only when N is not already lane/tile aligned
        x_flat = jnp.pad(x_flat, (0, total - N))
    x_lane = x_flat.reshape(rows_total, LANES)

    out_lane = pl.pallas_call(
        _fexp_kernel,
        out_shape=jax.ShapeDtypeStruct((rows_total, LANES), jnp.float32),
        grid_spec=pltpu.PrefetchScalarGridSpec(
            num_scalar_prefetch=0,
            grid=(grid_steps,),
            in_specs=[
                pl.BlockSpec(memory_space=pltpu.MemorySpace.SMEM),   # coeff (K,) scalars
                pl.BlockSpec((tile_rows, LANES), lambda i: (i, 0)),  # x block (VMEM)
            ],
            out_specs=pl.BlockSpec((tile_rows, LANES), lambda i: (i, 0)),
        ),
        compiler_params=pltpu.CompilerParams(
            dimension_semantics=("parallel",)),
    )(coeff, x_lane)

    out = out_lane.reshape(total, 1)
    if total != N:
        out = out[:N]
    return out


def _reference_forward(a, x):
    """Pure-JAX reference replicating the PyTorch module exactly."""
    K = a.shape[0]
    indices = jnp.arange(1, K + 1, dtype=jnp.float32)
    lmbd = 1.0 / jnp.sqrt(indices ** 2 * jnp.pi ** 2 + TAU ** 2)
    sin_args = jnp.pi * x @ indices.reshape(1, -1)
    coeff = (lmbd * a).reshape(1, -1)
    terms = jnp.sin(sin_args) * coeff
    return jnp.sum(terms, axis=1, keepdims=True)


if __name__ == "__main__":
    key = jax.random.PRNGKey(0)
    k_a, k_x = jax.random.split(key)

    K = 8          # number of expansion modes (len(a))
    N = 128        # number of sample points

    # Deterministic "parameter" a and input x.
    a = jax.random.normal(k_a, (K,), dtype=jnp.float32)
    x = jax.random.uniform(k_x, (N, 1), dtype=jnp.float32)

    out = jax.block_until_ready(function_expansion_forward(a, x))
    ref = _reference_forward(a, x)
    assert out.shape == (N, 1)
    assert jnp.allclose(out, ref, atol=2e-5, rtol=2e-5), "mismatch vs reference"

    # Non-lane-aligned N exercises the padding path (pads to 2 x 128, then slices).
    x2 = jax.random.uniform(jax.random.PRNGKey(1), (200, 1), dtype=jnp.float32)
    out2 = jax.block_until_ready(function_expansion_forward(a, x2))
    ref2 = _reference_forward(a, x2)
    assert out2.shape == (200, 1)
    assert jnp.allclose(out2, ref2, atol=2e-5, rtol=2e-5), "mismatch (padded N)"

    # Larger aligned N exercises the tiled, 2-step parallel path (no pad / slice).
    x3 = jax.random.uniform(jax.random.PRNGKey(2), (4096, 1), dtype=jnp.float32)
    out3 = jax.block_until_ready(function_expansion_forward(a, x3))
    ref3 = _reference_forward(a, x3)
    assert out3.shape == (4096, 1)
    assert jnp.allclose(out3, ref3, atol=2e-5, rtol=2e-5), "mismatch (tiled N)"

    print("KERNEL_OK")
</pallas_src>

<mosaic_0001>
module attributes {stable_mosaic.version = 11 : i64} {
  func.func @_fexp_kernel(%arg0: i32, %arg1: memref<8xf32, #tpu.memory_space<smem>>, %arg2: memref<1x128xf32, #tpu.memory_space<vmem>>, %arg3: memref<1x128xf32, #tpu.memory_space<vmem>>) attributes {dimension_semantics = [#tpu.dimension_semantics<parallel>], iteration_bounds = array<i64: 1>, scalar_prefetch = 0 : i64, scratch_operands = 0 : i64, tpu.core_type = #tpu.core_type<tc>, window_params = [{transform_indices = @transform_0, window_bounds = array<i64: 8>}, {transform_indices = @transform_1, window_bounds = array<i64: 1, 128>}, {transform_indices = @transform_2, window_bounds = array<i64: 1, 128>}]} {
    %c0 = arith.constant 0 : index
    %c0_0 = arith.constant 0 : index
    %0 = vector.load %arg2[%c0, %c0_0] : memref<1x128xf32, #tpu.memory_space<vmem>>, vector<1x128xf32>
    %cst = arith.constant 3.14159274 : f32
    %1 = vector.broadcast %cst : f32 to vector<1x128xf32>
    %2 = arith.mulf %1, %0 : vector<1x128xf32>
    %3 = math.sin %2 : vector<1x128xf32>
    %c0_1 = arith.constant 0 : index
    %4 = memref.load %arg1[%c0_1] : memref<8xf32, #tpu.memory_space<smem>>
    %5 = vector.broadcast %4 : f32 to vector<1x128xf32>
    %6 = arith.mulf %3, %5 : vector<1x128xf32>
    %7 = math.cos %2 : vector<1x128xf32>
    %cst_2 = arith.constant 2.000000e+00 : f32
    %8 = vector.broadcast %cst_2 : f32 to vector<1x128xf32>
    %9 = arith.mulf %8, %7 : vector<1x128xf32>
    %10 = arith.mulf %9, %3 : vector<1x128xf32>
    %c1 = arith.constant 1 : index
    %11 = memref.load %arg1[%c1] : memref<8xf32, #tpu.memory_space<smem>>
    %12 = vector.broadcast %11 : f32 to vector<1x128xf32>
    %13 = arith.mulf %10, %12 : vector<1x128xf32>
    %14 = arith.addf %6, %13 : vector<1x128xf32>
    %15 = arith.mulf %9, %10 : vector<1x128xf32>
    %16 = arith.subf %15, %3 : vector<1x128xf32>
    %c2 = arith.constant 2 : index
    %17 = memref.load %arg1[%c2] : memref<8xf32, #tpu.memory_space<smem>>
    %18 = vector.broadcast %17 : f32 to vector<1x128xf32>
    %19 = arith.mulf %16, %18 : vector<1x128xf32>
    %20 = arith.addf %14, %19 : vector<1x128xf32>
    %21 = arith.mulf %9, %16 : vector<1x128xf32>
    %22 = arith.subf %21, %10 : vector<1x128xf32>
    %c3 = arith.constant 3 : index
    %23 = memref.load %arg1[%c3] : memref<8xf32, #tpu.memory_space<smem>>
    %24 = vector.broadcast %23 : f32 to vector<1x128xf32>
    %25 = arith.mulf %22, %24 : vector<1x128xf32>
    %26 = arith.addf %20, %25 : vector<1x128xf32>
    %27 = arith.mulf %9, %22 : vector<1x128xf32>
    %28 = arith.subf %27, %16 : vector<1x128xf32>
    %c4 = arith.constant 4 : index
    %29 = memref.load %arg1[%c4] : memref<8xf32, #tpu.memory_space<smem>>
    %30 = vector.broadcast %29 : f32 to vector<1x128xf32>
    %31 = arith.mulf %28, %30 : vector<1x128xf32>
    %32 = arith.addf %26, %31 : vector<1x128xf32>
    %33 = arith.mulf %9, %28 : vector<1x128xf32>
    %34 = arith.subf %33, %22 : vector<1x128xf32>
    %c5 = arith.constant 5 : index
    %35 = memref.load %arg1[%c5] : memref<8xf32, #tpu.memory_space<smem>>
    %36 = vector.broadcast %35 : f32 to vector<1x128xf32>
    %37 = arith.mulf %34, %36 : vector<1x128xf32>
    %38 = arith.addf %32, %37 : vector<1x128xf32>
    %39 = arith.mulf %9, %34 : vector<1x128xf32>
    %40 = arith.subf %39, %28 : vector<1x128xf32>
    %c6 = arith.constant 6 : index
    %41 = memref.load %arg1[%c6] : memref<8xf32, #tpu.memory_space<smem>>
    %42 = vector.broadcast %41 : f32 to vector<1x128xf32>
    %43 = arith.mulf %40, %42 : vector<1x128xf32>
    %44 = arith.addf %38, %43 : vector<1x128xf32>
    %45 = arith.mulf %9, %40 : vector<1x128xf32>
    %46 = arith.subf %45, %34 : vector<1x128xf32>
    %c7 = arith.constant 7 : index
    %47 = memref.load %arg1[%c7] : memref<8xf32, #tpu.memory_space<smem>>
    %48 = vector.broadcast %47 : f32 to vector<1x128xf32>
    %49 = arith.mulf %46, %48 : vector<1x128xf32>
    %50 = arith.addf %44, %49 : vector<1x128xf32>
    %c0_3 = arith.constant 0 : index
    %c0_4 = arith.constant 0 : index
    %51 = vector.load %arg3[%c0_3, %c0_4] : memref<1x128xf32, #tpu.memory_space<vmem>>, vector<1x128xf32>
    tpu.vector_store %arg3[%c0_3, %c0_4], %50 {strides = array<i32>} : memref<1x128xf32, #tpu.memory_space<vmem>>, vector<1x128xf32>,
    return
  }
  func.func @transform_0(%arg0: i32) -> i32 {
    %c0_i32 = arith.constant 0 : i32
    %c0_i32_0 = arith.constant 0 : i32
    return %c0_i32 : i32
  }
  func.func @transform_1(%arg0: i32) -> (i32, i32) {
    %c0_i32 = arith.constant 0 : i32
    %c0_i32_0 = arith.constant 0 : i32
    return %arg0, %c0_i32 : i32, i32
  }
  func.func @transform_2(%arg0: i32) -> (i32, i32) {
    %c0_i32 = arith.constant 0 : i32
    %c0_i32_0 = arith.constant 0 : i32
    return %arg0, %c0_i32 : i32, i32
  }
}

</mosaic_0001>

<llo_original>
// kernel: tpu_custom_call.1
$region0: #{tpu_custom_call.1}
  #allocation0 [shape = 'u32[]', space=smem, size = 0x4, offset = 0x4, fixed_abs, tag = 'smem constant byte address 0x4 - core index']
  #allocation1 [shape = 'u32[144,128]{1,0:T(1,128)}', space=vmem, size = 0x12000, scoped, tag = 'internal scratch']
  %s0 = inlined_call_operand.hbm [shape: f32[8], index: 0, kind: input, shape index: {}]
  %s1 = inlined_call_operand.vmem [shape: f32[1,128], index: 1, kind: input, shape index: {}]
  %s2 = inlined_call_operand.hbm [shape: f32[1,128], index: 2, kind: output, shape index: {}]
  %s3 = sld [smem:[#allocation0]]
  $region22: #{tpu_custom_call.1} parent=0
    _
  %s5 = ssub.s32 1, %s3
  %s6 = scalar_select 0, %s5, %s3
  $region1: #{tpu_custom_call.1} parent=0
    #allocation2 [shape = 'u8[512]{0}', space=smem, size = 0x200, scoped, tag = 'input window, operand 0, single buffered']
    #allocation3 [shape = 's32[1]{0}', space=sflag, size = 0x4, scoped, tag = 'scoped memory for tpu_custom_call.1']
    #allocation4 [shape = 's32[1]{0}', space=sflag, size = 0x4, scoped, tag = 'scoped memory for tpu_custom_call.1']
    #allocation5 [shape = 'u8[512]{0}', space=vmem, size = 0x400, scoped, tag = 'output window, operand 0, single buffered']
    %7 = vsyncpa [#allocation4], 0
    %8 = vsyncpa [#allocation3], 0
    // Predicated region
    $region2: #{tpu_custom_call.1} parent=1 // pred_check
      _
    $region3: #{tpu_custom_call.1} parent=1 // pred_check_branch
      %10 = sbr.rel (0) target = $region5
    $region4: #{tpu_custom_call.1} parent=1 // pred_region
      %s12 = ssub.s32 16, 16
      %13 = vsyncadd [#allocation4], %s12
      %16 = dma.hbm_to_smem %s0, 16, [#allocation2], [#allocation4]
    $region5: #{tpu_custom_call.1} parent=1 // pred_fallthru
      _
    // Predicated region
    $region6: #{tpu_custom_call.1} parent=1 // pred_check
      _
    $region7: #{tpu_custom_call.1} parent=1 // pred_check_branch
      %18 = sbr.rel (0) target = $region9
    $region8: #{tpu_custom_call.1} parent=1 // pred_region
      _
    $region9: #{tpu_custom_call.1} parent=1 // pred_fallthru
      _
    // Predicated region
    $region10: #{tpu_custom_call.1} parent=1 // pred_check
      _
    $region11: #{tpu_custom_call.1} parent=1 // pred_check_branch
      %20 = sbr.rel (0) target = $region13
    $region12: #{tpu_custom_call.1} parent=1 // pred_region
      %21 = dma.done [#allocation4], 16
    $region13: #{tpu_custom_call.1} parent=1 // pred_fallthru
      _
    %22 = sfence
    %v23 = vld [vmem:[%s1] sm:$0x1]
    %v24 = vmul.f32 %v23, 3.1415927
    %v25 = vand.u32 2147483647, %v24
    %vm26 = vcmp.le.f32.partialorder %v25, 0.7853982
    %vm27 = vcmp.lt.s32.totalorder %v24, 0
    %v28 = vand.u32 %v24, 2139095040
    %v29 = vshrl.u32 %v28, 23
    %v30 = vsub.s32 %v29, 127
    %v31 = vand.u32 2147483647, %v24
    %v32 = vand.u32 %v31, 8388607
    %v33 = vor.u32 %v32, 8388608
    %v34 = vsub.s32 0, %v33
    %v35 = vadd.s32 %v30, 1
    %vm36 = vcmp.gt.s32.totalorder %v35, 0
    %v37 = vsel %vm36, %v35, 0
    %v38 = vshrl.u32 %v37, 5
    %v39 = vand.u32 %v37, 31
    %v40 = vsub.s32 32, %v39
    %v41 = vshrl.u32 683565275, %v40
    %v42 = vshll.u32 683565275, %v39
    %v43 = vshrl.u32 2475754826, %v40
    %v44 = vor.u32 %v42, %v43
    %v45 = vshll.u32 2475754826, %v39
    %v46 = vshrl.u32 2131351028, %v40
    %v47 = vor.u32 %v45, %v46
    %v48 = vshll.u32 2131351028, %v39
    %v49 = vshrl.u32 2102212464, %v40
    %v50 = vor.u32 %v48, %v49
    %v51 = vshll.u32 2102212464, %v39
    %v52 = vshrl.u32 920167782, %v40
    %v53 = vor.u32 %v51, %v52
    %v54 = vshll.u32 920167782, %v39
    %v55 = vshrl.u32 1326507024, %v40
    %v56 = vor.u32 %v54, %v55
    %vm57 = vcmp.lt.s32.totalorder %v38, 1
    %vm58 = vcmp.lt.s32.totalorder %v38, 2
    %vm59 = vcmp.lt.s32.totalorder %v38, 3
    %vm60 = vcmp.lt.s32.totalorder %v38, 4
    %v61 = vsel %vm57, %v41, %v44
    %v62 = vsel %vm60, %v50, 2102212464
    %v63 = vsel %vm59, %v47, %v62
    %v64 = vsel %vm58, %v61, %v63
    %v65 = vsel %vm57, %v44, %v47
    %v66 = vsel %vm60, %v53, 920167782
    %v67 = vsel %vm59, %v50, %v66
    %v68 = vsel %vm58, %v65, %v67
    %v69 = vsel %vm57, %v47, %v50
    %v70 = vsel %vm60, %v56, 1326507024
    %v71 = vsel %vm59, %v53, %v70
    %v72 = vsel %vm58, %v69, %v71
    %v73 = vshll.u32 %v33, 8
    %v74 = vmul.u32.u64.compose %v73, %v72
    %v75 = vextract.low.u32 %v74
    %v76 = vextract.high.u32 %v74
    %v77 = vmul.u32.u64.compose %v73, %v68
    %v78 = vextract.low.u32 %v77
    %v79 = vextract.high.u32 %v77
    %v80 = vmul.u32 %v73, %v64
    %v81 = vadd.s32 %v76, %v78
    %vm82 = vc.u32 %v76, %v78
    %v83 = vadd.s32 %v79, 1
    %v84 = vsel %vm82, %v83, %v79
    %v85 = vadd.s32 %v80, %v84
    %v86 = vadd.s32 %v85, 536870912
    %v87 = vshrl.u32 %v86, 30
    %v88 = vshll.u32 %v87, 30
    %v89 = vsub.s32 %v85, %v88
    %vm90 = vcmp.lt.s32.totalorder %v89, 0
    %v91 = vsub.s32 0, %v89
    %v92 = vsel %vm90, %v91, %v89
    %v93 = vclz %v92
    %v94 = vsub.s32 %v93, 2
    %vm95 = vcmp.gt.s32.totalorder 0, %v94
    %v96 = vsel %vm95, 0, %v94
    %v97 = vsub.s32 32, %v96
    %v98 = vshll.u32 %v89, %v96
    %v99 = vshrl.u32 %v81, %v97
    %v100 = vor.u32 %v98, %v99
    %v101 = vsub.s32 4294967266, %v96
    %v102 = vadd.s32 %v101, 127
    %v103 = vshll.u32 %v102, 23
    %v104 = vor.u32 4788187, %v103
    %v105 = vand.u32 2147483647, %v104
    %v107 = vcvt.s32.f32 %v100
    %v108 = vmul.f32 %v107, %v105
    %v109 = vxor.u32 %v108, 2147483648
    %v110 = vsel %vm27, %v109, %v108
    %v111 = vsub.s32 4, %v87
    %v112 = vsel %vm27, %v111, %v87
    %v113 = vsel %vm26, %v24, %v110
    %v114 = vsel %vm26, 0, %v112
    %v115 = vcosq.f32.pop %v113
    %v116 = vsinq.f32.pop %v113
    %vm117 = vweird.f32 %v24
    %v118 = vadd.s32 %v114, 3
    %v119 = vand.u32 %v118, 3
    %vm120 = vcmp.lt.s32.totalorder %v119, 2
    %vm121 = vcmp.eq.s32.totalorder %v119, 0
    %v122 = vxor.u32 %v116, 2147483648
    %v123 = vsel %vm121, %v115, %v122
    %vm124 = vcmp.eq.s32.totalorder %v119, 2
    %v125 = vxor.u32 %v115, 2147483648
    %v126 = vsel %vm124, %v125, %v116
    %v127 = vsel %vm120, %v123, %v126
    %v128 = vsel %vm117, nan, %v127
    %s129 = sld [smem:[#allocation2]]
    %v130 = vstv %s129
    %v131 = vmul.f32 %v128, %v130
    %v132 = vand.u32 2147483647, %v24
    %vm133 = vcmp.le.f32.partialorder %v132, 0.7853982
    %vm134 = vcmp.lt.s32.totalorder %v24, 0
    %v135 = vand.u32 %v24, 2139095040
    %v136 = vshrl.u32 %v135, 23
    %v137 = vsub.s32 %v136, 127
    %v138 = vand.u32 2147483647, %v24
    %v139 = vand.u32 %v138, 8388607
    %v140 = vor.u32 %v139, 8388608
    %v141 = vsub.s32 0, %v140
    %v142 = vadd.s32 %v137, 1
    %vm143 = vcmp.gt.s32.totalorder %v142, 0
    %v144 = vsel %vm143, %v142, 0
    %v145 = vshrl.u32 %v144, 5
    %v146 = vand.u32 %v144, 31
    %v147 = vsub.s32 32, %v146
    %v148 = vshrl.u32 683565275, %v147
    %v149 = vshll.u32 683565275, %v146
    %v150 = vshrl.u32 2475754826, %v147
    %v151 = vor.u32 %v149, %v150
    %v152 = vshll.u32 2475754826, %v146
    %v153 = vshrl.u32 2131351028, %v147
    %v154 = vor.u32 %v152, %v153
    %v155 = vshll.u32 2131351028, %v146
    %v156 = vshrl.u32 2102212464, %v147
    %v157 = vor.u32 %v155, %v156
    %v158 = vshll.u32 2102212464, %v146
    %v159 = vshrl.u32 920167782, %v147
    %v160 = vor.u32 %v158, %v159
    %v161 = vshll.u32 920167782, %v146
    %v162 = vshrl.u32 1326507024, %v147
    %v163 = vor.u32 %v161, %v162
    %vm164 = vcmp.lt.s32.totalorder %v145, 1
    %vm165 = vcmp.lt.s32.totalorder %v145, 2
    %vm166 = vcmp.lt.s32.totalorder %v145, 3
    %vm167 = vcmp.lt.s32.totalorder %v145, 4
    %v168 = vsel %vm164, %v148, %v151
    %v169 = vsel %vm167, %v157, 2102212464
    %v170 = vsel %vm166, %v154, %v169
    %v171 = vsel %vm165, %v168, %v170
    %v172 = vsel %vm164, %v151, %v154
    %v173 = vsel %vm167, %v160, 920167782
    %v174 = vsel %vm166, %v157, %v173
    %v175 = vsel %vm165, %v172, %v174
    %v176 = vsel %vm164, %v154, %v157
    %v177 = vsel %vm167, %v163, 1326507024
    %v178 = vsel %vm166, %v160, %v177
    %v179 = vsel %vm165, %v176, %v178
    %v180 = vshll.u32 %v140, 8
    %v181 = vmul.u32.u64.compose %v180, %v179
    %v182 = vextract.low.u32 %v181
    %v183 = vextract.high.u32 %v181
    %v184 = vmul.u32.u64.compose %v180, %v175
    %v185 = vextract.low.u32 %v184
    %v186 = vextract.high.u32 %v184
    %v187 = vmul.u32 %v180, %v171
    %v188 = vadd.s32 %v183, %v185
    %vm189 = vc.u32 %v183, %v185
    %v190 = vadd.s32 %v186, 1
    %v191 = vsel %vm189, %v190, %v186
    %v192 = vadd.s32 %v187, %v191
    %v193 = vadd.s32 %v192, 536870912
    %v194 = vshrl.u32 %v193, 30
    %v195 = vshll.u32 %v194, 30
    %v196 = vsub.s32 %v192, %v195
    %vm197 = vcmp.lt.s32.totalorder %v196, 0
    %v198 = vsub.s32 0, %v196
    %v199 = vsel %vm197, %v198, %v196
    %v200 = vclz %v199
    %v201 = vsub.s32 %v200, 2
    %vm202 = vcmp.gt.s32.totalorder 0, %v201
    %v203 = vsel %vm202, 0, %v201
    %v204 = vsub.s32 32, %v203
    %v205 = vshll.u32 %v196, %v203
    %v206 = vshrl.u32 %v188, %v204
    %v207 = vor.u32 %v205, %v206
    %v208 = vsub.s32 4294967266, %v203
    %v209 = vadd.s32 %v208, 127
    %v210 = vshll.u32 %v209, 23
    %v211 = vor.u32 4788187, %v210
    %v212 = vand.u32 2147483647, %v211
    %v214 = vcvt.s32.f32 %v207
    %v215 = vmul.f32 %v214, %v212
    %v216 = vxor.u32 %v215, 2147483648
    %v217 = vsel %vm134, %v216, %v215
    %v218 = vsub.s32 4, %v194
    %v219 = vsel %vm134, %v218, %v194
    %v220 = vsel %vm133, %v24, %v217
    %v221 = vsel %vm133, 0, %v219
    %v222 = vcosq.f32.pop %v220
    %v223 = vsinq.f32.pop %v220
    %vm224 = vweird.f32 %v24
    %v225 = vand.u32 %v221, 3
    %vm226 = vcmp.lt.s32.totalorder %v225, 2
    %vm227 = vcmp.eq.s32.totalorder %v225, 0
    %v228 = vxor.u32 %v223, 2147483648
    %v229 = vsel %vm227, %v222, %v228
    %vm230 = vcmp.eq.s32.totalorder %v225, 2
    %v231 = vxor.u32 %v222, 2147483648
    %v232 = vsel %vm230, %v231, %v223
    %v233 = vsel %vm226, %v229, %v232
    %v234 = vsel %vm224, nan, %v233
    %v235 = vmul.f32 %v234, 2.0
    %v236 = vmul.f32 %v235, %v128
    %s237 = sld [smem:[#allocation2 + $0x1]]
    %v238 = vstv %s237
    %v239 = vmul.f32 %v236, %v238
    %v240 = vadd.f32 %v131, %v239
    %v241 = vmul.f32 %v235, %v236
    %v242 = vsub.f32 %v241, %v128
    %s243 = sld [smem:[#allocation2 + $0x2]]
    %v244 = vstv %s243
    %v245 = vmul.f32 %v242, %v244
    %v246 = vadd.f32 %v240, %v245
    %v247 = vmul.f32 %v235, %v242
    %v248 = vsub.f32 %v247, %v236
    %s249 = sld [smem:[#allocation2 + $0x3]]
    %v250 = vstv %s249
    %v251 = vmul.f32 %v248, %v250
    %v252 = vadd.f32 %v246, %v251
    %v253 = vmul.f32 %v235, %v248
    %v254 = vsub.f32 %v253, %v242
    %s255 = sld [smem:[#allocation2 + $0x4]]
    %v256 = vstv %s255
    %v257 = vmul.f32 %v254, %v256
    %v258 = vadd.f32 %v252, %v257
    %v259 = vmul.f32 %v235, %v254
    %v260 = vsub.f32 %v259, %v248
    %s261 = sld [smem:[#allocation2 + $0x5]]
    %v262 = vstv %s261
    %v263 = vmul.f32 %v260, %v262
    %v264 = vadd.f32 %v258, %v263
    %v265 = vmul.f32 %v235, %v260
    %v266 = vsub.f32 %v265, %v254
    %s267 = sld [smem:[#allocation2 + $0x6]]
    %v268 = vstv %s267
    %v269 = vmul.f32 %v266, %v268
    %v270 = vadd.f32 %v264, %v269
    %v271 = vmul.f32 %v235, %v266
    %v272 = vsub.f32 %v271, %v260
    %s273 = sld [smem:[#allocation2 + $0x7]]
    %v274 = vstv %s273
    %v275 = vmul.f32 %v272, %v274
    %v276 = vadd.f32 %v270, %v275
    %277 = vst [vmem:[#allocation5] sm:$0x1] %v276
    // Predicated region
    $region14: #{tpu_custom_call.1} parent=1 // pred_check
      _
    $region15: #{tpu_custom_call.1} parent=1 // pred_check_branch
      %279 = sbr.rel (0) target = $region17
    $region16: #{tpu_custom_call.1} parent=1 // pred_region
      %s281 = ssub.s32 16, 16
      %282 = vsyncadd [#allocation3], %s281
      %s284 = sshll.u32 [#allocation5], 4
      %s285 = int_to_ptr.vmem [resolvable:$true] %s284
      %287 = dma.vmem_to_hbm [thread:$0]  %s285, 16, %s2, [#allocation3]
    $region17: #{tpu_custom_call.1} parent=1 // pred_fallthru
      _
    // Predicated region
    $region18: #{tpu_custom_call.1} parent=1 // pred_check
      _
    $region19: #{tpu_custom_call.1} parent=1 // pred_check_branch
      %289 = sbr.rel (0) target = $region21
    $region20: #{tpu_custom_call.1} parent=1 // pred_region
      %290 = dma.done [#allocation3], 16
    $region21: #{tpu_custom_call.1} parent=1 // pred_fallthru
      _
    %291 = vsyncpa [#allocation3], 1
    %292 = vsyncpa [#allocation4], 1

</llo_original>
